<compile_context>
chip_gen: v7x
topology: tpu7x:2x2x1
jax: 0.10.0
libtpu: 0.0.40
codegen_flags: <defaults>
</compile_context>

<pallas_src>
import jax
import jax.numpy as jnp
from jax.experimental import pallas as pl
from jax.experimental.pallas import tpu as pltpu

NEG_SLOPE = 0.01  # F.leaky_relu default negative_slope


# --------------------------------------------------------------------------
# Fused forward kernel: conv1 -> lrelu -> conv2 -> lrelu -> conv3 ->
#                       mean-pool -> dropout -> Linear -> softmax
# --------------------------------------------------------------------------
def gcn_forward_kernel(x_ref, adj_ref, w1_ref, b1_ref, w2_ref, b2_ref,
                       w3_ref, b3_ref, pool_ref, drop_ref, lw_ref, lb_ref,
                       out_ref):
    # Normalized adjacency A_hat = D^-1/2 (A + I) D^-1/2, bf16; loaded into
    # vregs once and reused by all three conv layers.
    adj = adj_ref[...]                                          # [N, N] bf16

    def gcn_layer(h, w_ref, b_ref, apply_act):
        # feature projection on the MXU: bf16 operands, f32 accumulation
        hw = jnp.dot(h.astype(jnp.bfloat16), w_ref[...],
                     preferred_element_type=jnp.float32)        # [N, H] f32
        # neighborhood aggregation: A_hat @ (X W)
        agg = jnp.dot(adj, hw.astype(jnp.bfloat16),
                      preferred_element_type=jnp.float32)       # [N, H] f32
        out = agg + b_ref[...]                                  # GCNConv bias (f32)
        if apply_act:                                           # fused F.leaky_relu
            out = jnp.where(out > 0, out, NEG_SLOPE * out)
        return out

    h = gcn_layer(x_ref[...], w1_ref, b1_ref, True)             # conv1 + leaky_relu
    h = gcn_layer(h, w2_ref, b2_ref, True)                      # conv2 + leaky_relu
    h = gcn_layer(h, w3_ref, b3_ref, False)                     # conv3

    # global_mean_pool as a [B, N] @ [N, H] matmul
    pooled = jnp.dot(pool_ref[...], h.astype(jnp.bfloat16),
                     preferred_element_type=jnp.float32)        # [B, H] f32
    # F.dropout (p=0.5, training default): pre-scaled Bernoulli mask
    dropped = pooled * drop_ref[...]
    # final Linear
    logits = jnp.dot(dropped.astype(jnp.bfloat16), lw_ref[...],
                     preferred_element_type=jnp.float32) + lb_ref[...]   # [B, O]
    # softmax(dim=1); denominator reciprocal on the EUP (own VLIW slot)
    m = jnp.max(logits, axis=-1, keepdims=True)
    p = jnp.exp(logits - m)
    inv = pl.reciprocal(jnp.sum(p, axis=-1, keepdims=True), approx=True)
    out_ref[...] = (p * inv).astype(out_ref.dtype)


# --------------------------------------------------------------------------
# Wrapper
# --------------------------------------------------------------------------
def gcn_classifier_forward(params, x, adj_norm, pool_mat, drop_mask):
    n, in_ch = x.shape
    b = pool_mat.shape[0]
    hidden = params["w1"].shape[1]
    out_ch = params["lw"].shape[1]

    # advisory cost estimate for XLA scheduling
    flops = 2 * n * (in_ch * hidden + n * hidden)               # layer 1
    flops += 2 * 2 * n * (hidden * hidden + n * hidden)         # layers 2, 3
    flops += 2 * (b * n * hidden + b * hidden * out_ch)         # pool + linear
    bytes_accessed = int(
        x.size * x.dtype.itemsize
        + adj_norm.size * adj_norm.dtype.itemsize
        + pool_mat.size * pool_mat.dtype.itemsize
        + drop_mask.size * drop_mask.dtype.itemsize
        + sum(int(v.size) * v.dtype.itemsize for v in params.values())
        + b * out_ch * 4)

    vmem = pl.BlockSpec(memory_space=pltpu.MemorySpace.VMEM)
    return pl.pallas_call(
        gcn_forward_kernel,
        out_shape=jax.ShapeDtypeStruct((b, out_ch), jnp.float32),
        in_specs=[vmem] * 12,
        out_specs=vmem,
        compiler_params=pltpu.CompilerParams(
            vmem_limit_bytes=32 * 1024 * 1024),   # explicit, safe on v5e/v6e/v7x
        cost_estimate=pl.CostEstimate(flops=int(flops),
                                      transcendentals=int(b * out_ch),
                                      bytes_accessed=bytes_accessed),
    )(x, adj_norm,
      params["w1"], params["b1"], params["w2"], params["b2"],
      params["w3"], params["b3"],
      pool_mat, drop_mask, params["lw"], params["lb"])


# --------------------------------------------------------------------------
# Pure-JAX reference (same precision flow) for a correctness check
# --------------------------------------------------------------------------
def gcn_classifier_reference(params, x, adj_norm, pool_mat, drop_mask):
    def layer(h, w, bias, act):
        hw = jnp.dot(h.astype(jnp.bfloat16), w, preferred_element_type=jnp.float32)
        agg = jnp.dot(adj_norm, hw.astype(jnp.bfloat16),
                      preferred_element_type=jnp.float32) + bias
        return jnp.where(agg > 0, agg, NEG_SLOPE * agg) if act else agg

    h = layer(x, params["w1"], params["b1"], True)
    h = layer(h, params["w2"], params["b2"], True)
    h = layer(h, params["w3"], params["b3"], False)
    pooled = jnp.dot(pool_mat, h.astype(jnp.bfloat16),
                     preferred_element_type=jnp.float32)
    dropped = pooled * drop_mask
    logits = jnp.dot(dropped.astype(jnp.bfloat16), params["lw"],
                     preferred_element_type=jnp.float32) + params["lb"]
    return jax.nn.softmax(logits, axis=1)


if __name__ == "__main__":
    # small, deterministic synthetic problem
    IN_CH, HIDDEN, OUT_CH = 8, 32, 2
    N_NODES, N_GRAPHS = 16, 2
    NODES_PER_GRAPH = N_NODES // N_GRAPHS

    key = jax.random.PRNGKey(0)
    ks = jax.random.split(key, 10)

    def init(k, shape, scale=0.1, dtype=jnp.float32):
        return (scale * jax.random.normal(k, shape)).astype(dtype)

    params = {
        # GCNConv weights shipped as bf16 (MXU operands), biases kept f32
        "w1": init(ks[0], (IN_CH, HIDDEN), dtype=jnp.bfloat16),
        "b1": init(ks[1], (1, HIDDEN)),
        "w2": init(ks[2], (HIDDEN, HIDDEN), dtype=jnp.bfloat16),
        "b2": init(ks[3], (1, HIDDEN)),
        "w3": init(ks[4], (HIDDEN, HIDDEN), dtype=jnp.bfloat16),
        "b3": init(ks[5], (1, HIDDEN)),
        # final Linear
        "lw": init(ks[6], (HIDDEN, OUT_CH), dtype=jnp.bfloat16),
        "lb": init(ks[7], (1, OUT_CH)),
    }

    # node features (bf16 MXU operand)
    x = jax.random.normal(ks[8], (N_NODES, IN_CH)).astype(jnp.bfloat16)

    # graph structure: two 8-node chains (undirected); GCNConv adds self-loops
    adj = jnp.zeros((N_NODES, N_NODES), jnp.float32)
    for g in range(N_GRAPHS):
        base = g * NODES_PER_GRAPH
        for i in range(NODES_PER_GRAPH - 1):
            s, d = base + i, base + i + 1
            adj = adj.at[d, s].set(1.0).at[s, d].set(1.0)
    adj = adj + jnp.eye(N_NODES, dtype=jnp.float32)          # add_self_loops=True
    deg = jnp.sum(adj, axis=1)
    dinv = 1.0 / jnp.sqrt(deg)
    adj_norm = (adj * dinv[:, None] * dinv[None, :]).astype(jnp.bfloat16)

    # batch vector -> mean-pool matrix [B, N]
    # TODO(synk): only global_mean_pool is implemented for the pool_method argument.
    batch = jnp.repeat(jnp.arange(N_GRAPHS), NODES_PER_GRAPH)
    pool_mat = (jax.nn.one_hot(batch, N_GRAPHS, dtype=jnp.float32).T
                / NODES_PER_GRAPH).astype(jnp.bfloat16)

    # F.dropout(x) default p=0.5, training=True: pre-scaled Bernoulli mask
    keep = jax.random.bernoulli(ks[9], 0.5, (N_GRAPHS, HIDDEN))
    drop_mask = keep.astype(jnp.float32) / 0.5

    out = gcn_classifier_forward(params, x, adj_norm, pool_mat, drop_mask)
    out = jax.block_until_ready(out)

    assert out.shape == (N_GRAPHS, OUT_CH)
    # rows of a softmax sum to ~1 (approx EUP reciprocal -> looser tolerance)
    assert jnp.allclose(jnp.sum(out, axis=1), 1.0, atol=3e-3)
    # check against a pure-JAX reference with the same precision flow
    ref = gcn_classifier_reference(params, x, adj_norm, pool_mat, drop_mask)
    assert jnp.allclose(out, ref, atol=3e-2), (out, ref)
    print("KERNEL_OK")
</pallas_src>

<mosaic_0001>
module attributes {stable_mosaic.version = 11 : i64} {
  func.func @gcn_forward_kernel(%arg0: memref<16x8xbf16, #tpu.memory_space<vmem>>, %arg1: memref<16x16xbf16, #tpu.memory_space<vmem>>, %arg2: memref<8x32xbf16, #tpu.memory_space<vmem>>, %arg3: memref<1x32xf32, #tpu.memory_space<vmem>>, %arg4: memref<32x32xbf16, #tpu.memory_space<vmem>>, %arg5: memref<1x32xf32, #tpu.memory_space<vmem>>, %arg6: memref<32x32xbf16, #tpu.memory_space<vmem>>, %arg7: memref<1x32xf32, #tpu.memory_space<vmem>>, %arg8: memref<2x16xbf16, #tpu.memory_space<vmem>>, %arg9: memref<2x32xf32, #tpu.memory_space<vmem>>, %arg10: memref<32x2xbf16, #tpu.memory_space<vmem>>, %arg11: memref<1x2xf32, #tpu.memory_space<vmem>>, %arg12: memref<2x2xf32, #tpu.memory_space<vmem>>) attributes {dimension_semantics = [], scalar_prefetch = 0 : i64, scratch_operands = 0 : i64, tpu.core_type = #tpu.core_type<tc>} {
    %c0 = arith.constant 0 : index
    %c0_0 = arith.constant 0 : index
    %0 = vector.load %arg1[%c0, %c0_0] : memref<16x16xbf16, #tpu.memory_space<vmem>>, vector<16x16xbf16>
    %c0_1 = arith.constant 0 : index
    %c0_2 = arith.constant 0 : index
    %1 = vector.load %arg0[%c0_1, %c0_2] : memref<16x8xbf16, #tpu.memory_space<vmem>>, vector<16x8xbf16>
    %c0_3 = arith.constant 0 : index
    %c0_4 = arith.constant 0 : index
    %2 = vector.load %arg2[%c0_3, %c0_4] : memref<8x32xbf16, #tpu.memory_space<vmem>>, vector<8x32xbf16>
    %cst = arith.constant dense<0.000000e+00> : vector<16x32xf32>
    %3 = tpu.matmul %1, %2, %cst {dimension_numbers = #tpu.dot_dimension_numbers<[1], [0], [0], [1], [0, 0, 1, 1], [], []>} : vector<16x8xbf16>, vector<8x32xbf16>, vector<16x32xf32> -> vector<16x32xf32>
    %4 = arith.truncf %3 : vector<16x32xf32> to vector<16x32xbf16>
    %cst_5 = arith.constant dense<0.000000e+00> : vector<16x32xf32>
    %5 = tpu.matmul %0, %4, %cst_5 {dimension_numbers = #tpu.dot_dimension_numbers<[1], [0], [0], [1], [0, 0, 1, 1], [], []>} : vector<16x16xbf16>, vector<16x32xbf16>, vector<16x32xf32> -> vector<16x32xf32>
    %c0_6 = arith.constant 0 : index
    %c0_7 = arith.constant 0 : index
    %6 = vector.load %arg3[%c0_6, %c0_7] : memref<1x32xf32, #tpu.memory_space<vmem>>, vector<1x32xf32>
    %7 = vector.broadcast %6 : vector<1x32xf32> to vector<16x32xf32>
    %8 = arith.addf %5, %7 : vector<16x32xf32>
    %cst_8 = arith.constant 0.000000e+00 : f32
    %9 = vector.broadcast %cst_8 : f32 to vector<16x32xf32>
    %10 = arith.cmpf ogt, %8, %9 : vector<16x32xf32>
    %cst_9 = arith.constant 0.00999999977 : f32
    %11 = vector.broadcast %cst_9 : f32 to vector<16x32xf32>
    %12 = arith.mulf %11, %8 : vector<16x32xf32>
    %13 = arith.select %10, %8, %12 : vector<16x32xi1>, vector<16x32xf32>
    %14 = arith.truncf %13 : vector<16x32xf32> to vector<16x32xbf16>
    %c0_10 = arith.constant 0 : index
    %c0_11 = arith.constant 0 : index
    %15 = vector.load %arg4[%c0_10, %c0_11] : memref<32x32xbf16, #tpu.memory_space<vmem>>, vector<32x32xbf16>
    %cst_12 = arith.constant dense<0.000000e+00> : vector<16x32xf32>
    %16 = tpu.matmul %14, %15, %cst_12 {dimension_numbers = #tpu.dot_dimension_numbers<[1], [0], [0], [1], [0, 0, 1, 1], [], []>} : vector<16x32xbf16>, vector<32x32xbf16>, vector<16x32xf32> -> vector<16x32xf32>
    %17 = arith.truncf %16 : vector<16x32xf32> to vector<16x32xbf16>
    %cst_13 = arith.constant dense<0.000000e+00> : vector<16x32xf32>
    %18 = tpu.matmul %0, %17, %cst_13 {dimension_numbers = #tpu.dot_dimension_numbers<[1], [0], [0], [1], [0, 0, 1, 1], [], []>} : vector<16x16xbf16>, vector<16x32xbf16>, vector<16x32xf32> -> vector<16x32xf32>
    %c0_14 = arith.constant 0 : index
    %c0_15 = arith.constant 0 : index
    %19 = vector.load %arg5[%c0_14, %c0_15] : memref<1x32xf32, #tpu.memory_space<vmem>>, vector<1x32xf32>
    %20 = vector.broadcast %19 : vector<1x32xf32> to vector<16x32xf32>
    %21 = arith.addf %18, %20 : vector<16x32xf32>
    %cst_16 = arith.constant 0.000000e+00 : f32
    %22 = vector.broadcast %cst_16 : f32 to vector<16x32xf32>
    %23 = arith.cmpf ogt, %21, %22 : vector<16x32xf32>
    %cst_17 = arith.constant 0.00999999977 : f32
    %24 = vector.broadcast %cst_17 : f32 to vector<16x32xf32>
    %25 = arith.mulf %24, %21 : vector<16x32xf32>
    %26 = arith.select %23, %21, %25 : vector<16x32xi1>, vector<16x32xf32>
    %27 = arith.truncf %26 : vector<16x32xf32> to vector<16x32xbf16>
    %c0_18 = arith.constant 0 : index
    %c0_19 = arith.constant 0 : index
    %28 = vector.load %arg6[%c0_18, %c0_19] : memref<32x32xbf16, #tpu.memory_space<vmem>>, vector<32x32xbf16>
    %cst_20 = arith.constant dense<0.000000e+00> : vector<16x32xf32>
    %29 = tpu.matmul %27, %28, %cst_20 {dimension_numbers = #tpu.dot_dimension_numbers<[1], [0], [0], [1], [0, 0, 1, 1], [], []>} : vector<16x32xbf16>, vector<32x32xbf16>, vector<16x32xf32> -> vector<16x32xf32>
    %30 = arith.truncf %29 : vector<16x32xf32> to vector<16x32xbf16>
    %cst_21 = arith.constant dense<0.000000e+00> : vector<16x32xf32>
    %31 = tpu.matmul %0, %30, %cst_21 {dimension_numbers = #tpu.dot_dimension_numbers<[1], [0], [0], [1], [0, 0, 1, 1], [], []>} : vector<16x16xbf16>, vector<16x32xbf16>, vector<16x32xf32> -> vector<16x32xf32>
    %c0_22 = arith.constant 0 : index
    %c0_23 = arith.constant 0 : index
    %32 = vector.load %arg7[%c0_22, %c0_23] : memref<1x32xf32, #tpu.memory_space<vmem>>, vector<1x32xf32>
    %33 = vector.broadcast %32 : vector<1x32xf32> to vector<16x32xf32>
    %34 = arith.addf %31, %33 : vector<16x32xf32>
    %c0_24 = arith.constant 0 : index
    %c0_25 = arith.constant 0 : index
    %35 = vector.load %arg8[%c0_24, %c0_25] : memref<2x16xbf16, #tpu.memory_space<vmem>>, vector<2x16xbf16>
    %36 = arith.truncf %34 : vector<16x32xf32> to vector<16x32xbf16>
    %cst_26 = arith.constant dense<0.000000e+00> : vector<2x32xf32>
    %37 = tpu.matmul %35, %36, %cst_26 {dimension_numbers = #tpu.dot_dimension_numbers<[1], [0], [0], [1], [0, 0, 1, 1], [], []>} : vector<2x16xbf16>, vector<16x32xbf16>, vector<2x32xf32> -> vector<2x32xf32>
    %c0_27 = arith.constant 0 : index
    %c0_28 = arith.constant 0 : index
    %38 = vector.load %arg9[%c0_27, %c0_28] : memref<2x32xf32, #tpu.memory_space<vmem>>, vector<2x32xf32>
    %39 = arith.mulf %37, %38 : vector<2x32xf32>
    %40 = arith.truncf %39 : vector<2x32xf32> to vector<2x32xbf16>
    %c0_29 = arith.constant 0 : index
    %c0_30 = arith.constant 0 : index
    %41 = vector.load %arg10[%c0_29, %c0_30] : memref<32x2xbf16, #tpu.memory_space<vmem>>, vector<32x2xbf16>
    %cst_31 = arith.constant dense<0.000000e+00> : vector<2x2xf32>
    %42 = tpu.matmul %40, %41, %cst_31 {dimension_numbers = #tpu.dot_dimension_numbers<[1], [0], [0], [1], [0, 0, 1, 1], [], []>} : vector<2x32xbf16>, vector<32x2xbf16>, vector<2x2xf32> -> vector<2x2xf32>
    %c0_32 = arith.constant 0 : index
    %c0_33 = arith.constant 0 : index
    %43 = vector.load %arg11[%c0_32, %c0_33] : memref<1x2xf32, #tpu.memory_space<vmem>>, vector<1x2xf32>
    %44 = vector.broadcast %43 : vector<1x2xf32> to vector<2x2xf32>
    %45 = arith.addf %42, %44 : vector<2x2xf32>
    %cst_34 = arith.constant dense<0xFF800000> : vector<2xf32>
    %46 = vector.multi_reduction <maximumf>, %45, %cst_34 [1] : vector<2x2xf32> to vector<2xf32>
    %47 = vector.shape_cast %46 : vector<2xf32> to vector<2x1xf32>
    %48 = vector.broadcast %47 : vector<2x1xf32> to vector<2x2xf32>
    %49 = arith.subf %45, %48 : vector<2x2xf32>
    %50 = math.exp %49 : vector<2x2xf32>
    %cst_35 = arith.constant dense<0.000000e+00> : vector<2xf32>
    %51 = vector.multi_reduction <add>, %50, %cst_35 [1] : vector<2x2xf32> to vector<2xf32>
    %52 = vector.shape_cast %51 : vector<2xf32> to vector<2x1xf32>
    %53 = tpu.reciprocal %52 {approx = true} : vector<2x1xf32> -> vector<2x1xf32>
    %54 = vector.broadcast %53 : vector<2x1xf32> to vector<2x2xf32>
    %55 = arith.mulf %50, %54 : vector<2x2xf32>
    %c0_36 = arith.constant 0 : index
    %c0_37 = arith.constant 0 : index
    %56 = vector.load %arg12[%c0_36, %c0_37] : memref<2x2xf32, #tpu.memory_space<vmem>>, vector<2x2xf32>
    tpu.vector_store %arg12[%c0_36, %c0_37], %55 {strides = array<i32>} : memref<2x2xf32, #tpu.memory_space<vmem>>, vector<2x2xf32>,
    return
  }
}

</mosaic_0001>

<llo_original>
// kernel: tpu_custom_call.1
$region0: #{tpu_custom_call.1}
  #allocation0 [shape = 'u32[]', space=smem, size = 0x4, offset = 0x4, fixed_abs, tag = 'smem constant byte address 0x4 - core index']
  #allocation1 [shape = 'u32[144,128]{1,0:T(1,128)}', space=vmem, size = 0x12000, scoped, tag = 'internal scratch']
  %s0 = inlined_call_operand.vmem [shape: bf16[16,8], index: 0, kind: input, shape index: {}]
  %s1 = inlined_call_operand.hbm [shape: bf16[16,16], index: 1, kind: input, shape index: {}]
  %s2 = inlined_call_operand.vmem [shape: bf16[8,32], index: 2, kind: input, shape index: {}]
  %s3 = inlined_call_operand.vmem [shape: f32[1,32], index: 3, kind: input, shape index: {}]
  %s4 = inlined_call_operand.vmem [shape: bf16[32,32], index: 4, kind: input, shape index: {}]
  %s5 = inlined_call_operand.vmem [shape: f32[1,32], index: 5, kind: input, shape index: {}]
  %s6 = inlined_call_operand.vmem [shape: bf16[32,32], index: 6, kind: input, shape index: {}]
  %s7 = inlined_call_operand.vmem [shape: f32[1,32], index: 7, kind: input, shape index: {}]
  %s8 = inlined_call_operand.vmem [shape: bf16[2,16], index: 8, kind: input, shape index: {}]
  %s9 = inlined_call_operand.vmem [shape: f32[2,32], index: 9, kind: input, shape index: {}]
  %s10 = inlined_call_operand.vmem [shape: bf16[32,2], index: 10, kind: input, shape index: {}]
  %s11 = inlined_call_operand.vmem [shape: f32[1,2], index: 11, kind: input, shape index: {}]
  %s12 = inlined_call_operand.hbm [shape: f32[2,2], index: 12, kind: output, shape index: {}]
  %s13 = sld [smem:[#allocation0]]
  $region62: #{tpu_custom_call.1} parent=0
    _
  %s15 = ssub.s32 1, %s13
  %s16 = scalar_select 0, %s15, %s13
  $region1: #{tpu_custom_call.1} parent=0
    #allocation2 [shape = 'u8[4096]{0}', space=vmem, size = 0x1000, scoped, tag = 'input window, operand 1, single buffered']
    #allocation3 [shape = 's32[1]{0}', space=sflag, size = 0x4, scoped, tag = 'scoped memory for tpu_custom_call.1']
    #allocation4 [shape = 's32[1]{0}', space=sflag, size = 0x4, scoped, tag = 'scoped memory for tpu_custom_call.1']
    #allocation5 [shape = 'u8[1024]{0}', space=vmem, size = 0x400, scoped, tag = 'output window, operand 0, single buffered']
    %17 = vsyncpa [#allocation3], 0
    %18 = vsyncpa [#allocation4], 0
    // Predicated region
    $region2: #{tpu_custom_call.1} parent=1 // pred_check
      _
    $region3: #{tpu_custom_call.1} parent=1 // pred_check_branch
      %20 = sbr.rel (0) target = $region5
    $region4: #{tpu_custom_call.1} parent=1 // pred_region
      _
    $region5: #{tpu_custom_call.1} parent=1 // pred_fallthru
      _
    // Predicated region
    $region6: #{tpu_custom_call.1} parent=1 // pred_check
      _
    $region7: #{tpu_custom_call.1} parent=1 // pred_check_branch
      %22 = sbr.rel (0) target = $region9
    $region8: #{tpu_custom_call.1} parent=1 // pred_region
      %s24 = ssub.s32 128, 128
      %25 = vsyncadd [#allocation3], %s24
      %s26 = sshll.u32 [#allocation2], 4
      %s27 = int_to_ptr.vmem [resolvable:$true] %s26
      %32 = dma.hbm_to_vmem [thread:$0]  %s1, 128, %s27, [#allocation3], 64, 64, 4
    $region9: #{tpu_custom_call.1} parent=1 // pred_fallthru
      _
    // Predicated region
    $region10: #{tpu_custom_call.1} parent=1 // pred_check
      _
    $region11: #{tpu_custom_call.1} parent=1 // pred_check_branch
      %34 = sbr.rel (0) target = $region13
    $region12: #{tpu_custom_call.1} parent=1 // pred_region
      _
    $region13: #{tpu_custom_call.1} parent=1 // pred_fallthru
      _
    // Predicated region
    $region14: #{tpu_custom_call.1} parent=1 // pred_check
      _
    $region15: #{tpu_custom_call.1} parent=1 // pred_check_branch
      %36 = sbr.rel (0) target = $region17
    $region16: #{tpu_custom_call.1} parent=1 // pred_region
      _
    $region17: #{tpu_custom_call.1} parent=1 // pred_fallthru
      _
    // Predicated region
    $region18: #{tpu_custom_call.1} parent=1 // pred_check
      _
    $region19: #{tpu_custom_call.1} parent=1 // pred_check_branch
      %38 = sbr.rel (0) target = $region21
    $region20: #{tpu_custom_call.1} parent=1 // pred_region
      _
    $region21: #{tpu_custom_call.1} parent=1 // pred_fallthru
      _
    // Predicated region
    $region22: #{tpu_custom_call.1} parent=1 // pred_check
      _
    $region23: #{tpu_custom_call.1} parent=1 // pred_check_branch
      %40 = sbr.rel (0) target = $region25
    $region24: #{tpu_custom_call.1} parent=1 // pred_region
      _
    $region25: #{tpu_custom_call.1} parent=1 // pred_fallthru
      _
    // Predicated region
    $region26: #{tpu_custom_call.1} parent=1 // pred_check
      _
    $region27: #{tpu_custom_call.1} parent=1 // pred_check_branch
      %42 = sbr.rel (0) target = $region29
    $region28: #{tpu_custom_call.1} parent=1 // pred_region
      _
    $region29: #{tpu_custom_call.1} parent=1 // pred_fallthru
      _
    // Predicated region
    $region30: #{tpu_custom_call.1} parent=1 // pred_check
      _
    $region31: #{tpu_custom_call.1} parent=1 // pred_check_branch
      %44 = sbr.rel (0) target = $region33
    $region32: #{tpu_custom_call.1} parent=1 // pred_region
      _
    $region33: #{tpu_custom_call.1} parent=1 // pred_fallthru
      _
    // Predicated region
    $region34: #{tpu_custom_call.1} parent=1 // pred_check
      _
    $region35: #{tpu_custom_call.1} parent=1 // pred_check_branch
      %46 = sbr.rel (0) target = $region37
    $region36: #{tpu_custom_call.1} parent=1 // pred_region
      _
    $region37: #{tpu_custom_call.1} parent=1 // pred_fallthru
      _
    // Predicated region
    $region38: #{tpu_custom_call.1} parent=1 // pred_check
      _
    $region39: #{tpu_custom_call.1} parent=1 // pred_check_branch
      %48 = sbr.rel (0) target = $region41
    $region40: #{tpu_custom_call.1} parent=1 // pred_region
      _
    $region41: #{tpu_custom_call.1} parent=1 // pred_fallthru
      _
    // Predicated region
    $region42: #{tpu_custom_call.1} parent=1 // pred_check
      _
    $region43: #{tpu_custom_call.1} parent=1 // pred_check_branch
      %50 = sbr.rel (0) target = $region45
    $region44: #{tpu_custom_call.1} parent=1 // pred_region
      _
    $region45: #{tpu_custom_call.1} parent=1 // pred_fallthru
      _
    // Predicated region
    $region46: #{tpu_custom_call.1} parent=1 // pred_check
      _
    $region47: #{tpu_custom_call.1} parent=1 // pred_check_branch
      %52 = sbr.rel (0) target = $region49
    $region48: #{tpu_custom_call.1} parent=1 // pred_region
      _
    $region49: #{tpu_custom_call.1} parent=1 // pred_fallthru
      _
    // Predicated region
    $region50: #{tpu_custom_call.1} parent=1 // pred_check
      _
    $region51: #{tpu_custom_call.1} parent=1 // pred_check_branch
      %54 = sbr.rel (0) target = $region53
    $region52: #{tpu_custom_call.1} parent=1 // pred_region
      %55 = dma.done [#allocation3], 128
    $region53: #{tpu_custom_call.1} parent=1 // pred_fallthru
      _
    %v57 = vld [vmem:[#allocation2] sm:$0xf]
    %v58 = vld [vmem:[#allocation2 + $0x4] sm:$0xf]
    %v59 = vld [vmem:[%s0] sm:$0xf]
    %v60 = vld [vmem:[%s0 + $0x4] sm:$0xf]
    %v61 = vld [vmem:[%s2] sm:$0xf]
    %v64 = vunpack.c.l.b16 %v59
    %v65 = vunpack.c.l.b16 %v60
    %v66 = vpack.c.b16 %v65, %v64
    %vm67 = vcmask 64512
    %v69 = vsel %vm67, %v66, 0
    %vm71 = vcmask 1043456
    %v73 = vsel %vm71, %v61, 0
    %75 = vmatprep.subr.bf16.mxu0 0
    %76 = vmatpush1.bf16.msra.mxu0 %v73
    %77 = vmatprep.subr.bf16.mxu0 0
    %78 = vmatpush1.bf16.msra.mxu0 0
    %79 = vmatprep.subr.bf16.mxu0 0
    %80 = vmatpush1.bf16.msra.mxu0 0
    %81 = vmatprep.subr.bf16.mxu0 0
    %82 = vmatpush1.bf16.msra.mxu0 0
    %83 = vmatprep.subr.bf16.mxu0 0
    %84 = vmatpush1.bf16.msra.mxu0 0
    %85 = vmatprep.subr.bf16.mxu0 0
    %86 = vmatpush1.bf16.msra.mxu0 0
    %87 = vmatprep.subr.bf16.mxu0 0
    %88 = vmatpush1.bf16.msra.mxu0 0
    %89 = vmatprep.subr.bf16.mxu0 0
    %90 = vmatpush1.bf16.msra.mxu0 0
    %91 = vmatprep.subr.bf16.mxu0 0
    %92 = vmatpush1.bf16.msra.mxu0 0
    %93 = vmatprep.subr.bf16.mxu0 0
    %94 = vmatpush1.bf16.msra.mxu0 0
    %95 = vmatprep.subr.bf16.mxu0 0
    %96 = vmatpush1.bf16.msra.mxu0 0
    %97 = vmatprep.subr.bf16.mxu0 0
    %98 = vmatpush1.bf16.msra.mxu0 0
    %99 = vmatprep.subr.bf16.mxu0 0
    %100 = vmatpush1.bf16.msra.mxu0 0
    %101 = vmatprep.subr.bf16.mxu0 0
    %102 = vmatpush1.bf16.msra.mxu0 0
    %103 = vmatprep.subr.bf16.mxu0 0
    %104 = vmatpush1.bf16.msra.mxu0 0
    %105 = vmatprep.subr.bf16.mxu0 0
    %106 = vmatpush1.bf16.msra.mxu0 0
    %107 = vmatprep.mubr.bf16.mxu0 0
    %108 = vmatmul.mubr.bf16.gmra.mrb[0].mxu0 %v69
    %v109 = vpop.f32.mrb[0].mxu0
    %v110 = vadd.f32 0.0, %v109
    %v111 = vpop.f32.mrb[0].mxu0
    %v112 = vpop.f32.mrb[0].mxu0
    %v113 = vadd.f32 0.0, %v112
    %v114 = vpop.f32.mrb[0].mxu0
    %115 = vdwg.mxu0
    %v116 = vpack.c.bf16 %v113, %v110
    %v117 = vld [vmem:[%s3] sm:$0x1]
    %v119 = vlaneseq
    %v120 = vshrl.u32 %v119, 7
    %v121 = vsub.s32 0, %v120
    %v122 = vrot.slane %v117, %v121
    %v126 = vunpack.c.l.b16 %v57
    %v127 = vunpack.c.l.b16 %v58
    %v128 = vpack.c.b16 %v127, %v126
    %vm129 = vcmask 130048
    %v131 = vsel %vm129, %v128, 0
    %133 = vmatprep.subr.bf16.mxu0 0
    %134 = vmatpush1.bf16.msra.mxu0 %v116
    %135 = vmatprep.subr.bf16.mxu0 0
    %136 = vmatpush1.bf16.msra.mxu0 0
    %137 = vmatprep.subr.bf16.mxu0 0
    %138 = vmatpush1.bf16.msra.mxu0 0
    %139 = vmatprep.subr.bf16.mxu0 0
    %140 = vmatpush1.bf16.msra.mxu0 0
    %141 = vmatprep.subr.bf16.mxu0 0
    %142 = vmatpush1.bf16.msra.mxu0 0
    %143 = vmatprep.subr.bf16.mxu0 0
    %144 = vmatpush1.bf16.msra.mxu0 0
    %145 = vmatprep.subr.bf16.mxu0 0
    %146 = vmatpush1.bf16.msra.mxu0 0
    %147 = vmatprep.subr.bf16.mxu0 0
    %148 = vmatpush1.bf16.msra.mxu0 0
    %149 = vmatprep.subr.bf16.mxu0 0
    %150 = vmatpush1.bf16.msra.mxu0 0
    %151 = vmatprep.subr.bf16.mxu0 0
    %152 = vmatpush1.bf16.msra.mxu0 0
    %153 = vmatprep.subr.bf16.mxu0 0
    %154 = vmatpush1.bf16.msra.mxu0 0
    %155 = vmatprep.subr.bf16.mxu0 0
    %156 = vmatpush1.bf16.msra.mxu0 0
    %157 = vmatprep.subr.bf16.mxu0 0
    %158 = vmatpush1.bf16.msra.mxu0 0
    %159 = vmatprep.subr.bf16.mxu0 0
    %160 = vmatpush1.bf16.msra.mxu0 0
    %161 = vmatprep.subr.bf16.mxu0 0
    %162 = vmatpush1.bf16.msra.mxu0 0
    %163 = vmatprep.subr.bf16.mxu0 0
    %164 = vmatpush1.bf16.msra.mxu0 0
    %165 = vmatprep.mubr.bf16.mxu0 0
    %166 = vmatmul.mubr.bf16.gmra.mrb[0].mxu0 %v131
    %v167 = vpop.f32.mrb[0].mxu0
    %v168 = vadd.f32 %v122, %v167
    %v169 = vpop.f32.mrb[0].mxu0
    %v170 = vpop.f32.mrb[0].mxu0
    %v171 = vadd.f32 %v122, %v170
    %v172 = vpop.f32.mrb[0].mxu0
    %173 = vdwg.mxu0
    %vm174 = vcmp.gt.f32.partialorder %v168, 0.0
    %vm175 = vcmp.gt.f32.partialorder %v171, 0.0
    %v176 = vmul.f32 %v168, 0.01
    %v177 = vmul.f32 %v171, 0.01
    %v178 = vsel %vm174, %v168, %v176
    %v179 = vsel %vm175, %v171, %v177
    %v180 = vpack.c.bf16 %v179, %v178
    %v181 = vld [vmem:[%s4] sm:$0xf]
    %v182 = vld [vmem:[%s4 + $0x4] sm:$0xf]
    %v183 = vld [vmem:[%s4 + $0x8] sm:$0xf]
    %v184 = vld [vmem:[%s4 + $0xc] sm:$0xf]
    %v189 = vunpack.c.l.b16 %v181
    %v190 = vunpack.c.l.b16 %v182
    %v191 = vunpack.c.l.b16 %v183
    %v192 = vunpack.c.l.b16 %v184
    %v193 = vpack.c.b16 %v190, %v189
    %v194 = vpack.c.b16 %v192, %v191
    %vm197 = vcmask 261120
    %v199 = vsel %vm197, %v180, 0
    %201 = vmatprep.subr.bf16.mxu0 0
    %202 = vmatpush1.bf16.msra.mxu0 %v193
    %203 = vmatprep.subr.bf16.mxu0 0
    %204 = vmatpush1.bf16.msra.mxu0 %v194
    %205 = vmatprep.subr.bf16.mxu0 0
    %206 = vmatpush1.bf16.msra.mxu0 0
    %207 = vmatprep.subr.bf16.mxu0 0
    %208 = vmatpush1.bf16.msra.mxu0 0
    %209 = vmatprep.subr.bf16.mxu0 0
    %210 = vmatpush1.bf16.msra.mxu0 0
    %211 = vmatprep.subr.bf16.mxu0 0
    %212 = vmatpush1.bf16.msra.mxu0 0
    %213 = vmatprep.subr.bf16.mxu0 0
    %214 = vmatpush1.bf16.msra.mxu0 0
    %215 = vmatprep.subr.bf16.mxu0 0
    %216 = vmatpush1.bf16.msra.mxu0 0
    %217 = vmatprep.subr.bf16.mxu0 0
    %218 = vmatpush1.bf16.msra.mxu0 0
    %219 = vmatprep.subr.bf16.mxu0 0
    %220 = vmatpush1.bf16.msra.mxu0 0
    %221 = vmatprep.subr.bf16.mxu0 0
    %222 = vmatpush1.bf16.msra.mxu0 0
    %223 = vmatprep.subr.bf16.mxu0 0
    %224 = vmatpush1.bf16.msra.mxu0 0
    %225 = vmatprep.subr.bf16.mxu0 0
    %226 = vmatpush1.bf16.msra.mxu0 0
    %227 = vmatprep.subr.bf16.mxu0 0
    %228 = vmatpush1.bf16.msra.mxu0 0
    %229 = vmatprep.subr.bf16.mxu0 0
    %230 = vmatpush1.bf16.msra.mxu0 0
    %231 = vmatprep.subr.bf16.mxu0 0
    %232 = vmatpush1.bf16.msra.mxu0 0
    %233 = vmatprep.mubr.bf16.mxu0 0
    %234 = vmatmul.mubr.bf16.gmra.mrb[0].mxu0 %v199
    %v235 = vpop.f32.mrb[0].mxu0
    %v236 = vadd.f32 0.0, %v235
    %v237 = vpop.f32.mrb[0].mxu0
    %v238 = vpop.f32.mrb[0].mxu0
    %v239 = vadd.f32 0.0, %v238
    %v240 = vpop.f32.mrb[0].mxu0
    %241 = vdwg.mxu0
    %v242 = vpack.c.bf16 %v239, %v236
    %v243 = vld [vmem:[%s5] sm:$0x1]
    %v245 = vlaneseq
    %v246 = vshrl.u32 %v245, 7
    %v247 = vsub.s32 0, %v246
    %v248 = vrot.slane %v243, %v247
    %250 = vmatprep.subr.bf16.mxu0 0
    %251 = vmatpush1.bf16.msra.mxu0 %v242
    %252 = vmatprep.subr.bf16.mxu0 0
    %253 = vmatpush1.bf16.msra.mxu0 0
    %254 = vmatprep.subr.bf16.mxu0 0
    %255 = vmatpush1.bf16.msra.mxu0 0
    %256 = vmatprep.subr.bf16.mxu0 0
    %257 = vmatpush1.bf16.msra.mxu0 0
    %258 = vmatprep.subr.bf16.mxu0 0
    %259 = vmatpush1.bf16.msra.mxu0 0
    %260 = vmatprep.subr.bf16.mxu0 0
    %261 = vmatpush1.bf16.msra.mxu0 0
    %262 = vmatprep.subr.bf16.mxu0 0
    %263 = vmatpush1.bf16.msra.mxu0 0
    %264 = vmatprep.subr.bf16.mxu0 0
    %265 = vmatpush1.bf16.msra.mxu0 0
    %266 = vmatprep.subr.bf16.mxu0 0
    %267 = vmatpush1.bf16.msra.mxu0 0
    %268 = vmatprep.subr.bf16.mxu0 0
    %269 = vmatpush1.bf16.msra.mxu0 0
    %270 = vmatprep.subr.bf16.mxu0 0
    %271 = vmatpush1.bf16.msra.mxu0 0
    %272 = vmatprep.subr.bf16.mxu0 0
    %273 = vmatpush1.bf16.msra.mxu0 0
    %274 = vmatprep.subr.bf16.mxu0 0
    %275 = vmatpush1.bf16.msra.mxu0 0
    %276 = vmatprep.subr.bf16.mxu0 0
    %277 = vmatpush1.bf16.msra.mxu0 0
    %278 = vmatprep.subr.bf16.mxu0 0
    %279 = vmatpush1.bf16.msra.mxu0 0
    %280 = vmatprep.subr.bf16.mxu0 0
    %281 = vmatpush1.bf16.msra.mxu0 0
    %282 = vmatprep.mubr.bf16.mxu0 0
    %283 = vmatmul.mubr.bf16.gmra.mrb[0].mxu0 %v131
    %v284 = vpop.f32.mrb[0].mxu0
    %v285 = vadd.f32 %v248, %v284
    %v286 = vpop.f32.mrb[0].mxu0
    %v287 = vpop.f32.mrb[0].mxu0
    %v288 = vadd.f32 %v248, %v287
    %v289 = vpop.f32.mrb[0].mxu0
    %290 = vdwg.mxu0
    %vm291 = vcmp.gt.f32.partialorder %v285, 0.0
    %vm292 = vcmp.gt.f32.partialorder %v288, 0.0
    %v293 = vmul.f32 %v285, 0.01
    %v294 = vmul.f32 %v288, 0.01
    %v295 = vsel %vm291, %v285, %v293
    %v296 = vsel %vm292, %v288, %v294
    %v297 = vpack.c.bf16 %v296, %v295
    %v298 = vld [vmem:[%s6] sm:$0xf]
    %v299 = vld [vmem:[%s6 + $0x4] sm:$0xf]
    %v300 = vld [vmem:[%s6 + $0x8] sm:$0xf]
    %v301 = vld [vmem:[%s6 + $0xc] sm:$0xf]
    %v306 = vunpack.c.l.b16 %v298
    %v307 = vunpack.c.l.b16 %v299
    %v308 = vunpack.c.l.b16 %v300
    %v309 = vunpack.c.l.b16 %v301
    %v310 = vpack.c.b16 %v307, %v306
    %v311 = vpack.c.b16 %v309, %v308
    %v315 = vsel %vm197, %v297, 0
    %317 = vmatprep.subr.bf16.mxu0 0
    %318 = vmatpush1.bf16.msra.mxu0 %v310
    %319 = vmatprep.subr.bf16.mxu0 0
    %320 = vmatpush1.bf16.msra.mxu0 %v311
    %321 = vmatprep.subr.bf16.mxu0 0
    %322 = vmatpush1.bf16.msra.mxu0 0
    %323 = vmatprep.subr.bf16.mxu0 0
    %324 = vmatpush1.bf16.msra.mxu0 0
    %325 = vmatprep.subr.bf16.mxu0 0
    %326 = vmatpush1.bf16.msra.mxu0 0
    %327 = vmatprep.subr.bf16.mxu0 0
    %328 = vmatpush1.bf16.msra.mxu0 0
    %329 = vmatprep.subr.bf16.mxu0 0
    %330 = vmatpush1.bf16.msra.mxu0 0
    %331 = vmatprep.subr.bf16.mxu0 0
    %332 = vmatpush1.bf16.msra.mxu0 0
    %333 = vmatprep.subr.bf16.mxu0 0
    %334 = vmatpush1.bf16.msra.mxu0 0
    %335 = vmatprep.subr.bf16.mxu0 0
    %336 = vmatpush1.bf16.msra.mxu0 0
    %337 = vmatprep.subr.bf16.mxu0 0
    %338 = vmatpush1.bf16.msra.mxu0 0
    %339 = vmatprep.subr.bf16.mxu0 0
    %340 = vmatpush1.bf16.msra.mxu0 0
    %341 = vmatprep.subr.bf16.mxu0 0
    %342 = vmatpush1.bf16.msra.mxu0 0
    %343 = vmatprep.subr.bf16.mxu0 0
    %344 = vmatpush1.bf16.msra.mxu0 0
    %345 = vmatprep.subr.bf16.mxu0 0
    %346 = vmatpush1.bf16.msra.mxu0 0
    %347 = vmatprep.subr.bf16.mxu0 0
    %348 = vmatpush1.bf16.msra.mxu0 0
    %349 = vmatprep.mubr.bf16.mxu0 0
    %350 = vmatmul.mubr.bf16.gmra.mrb[0].mxu0 %v315
    %v351 = vpop.f32.mrb[0].mxu0
    %v352 = vadd.f32 0.0, %v351
    %v353 = vpop.f32.mrb[0].mxu0
    %v354 = vpop.f32.mrb[0].mxu0
    %v355 = vadd.f32 0.0, %v354
    %v356 = vpop.f32.mrb[0].mxu0
    %357 = vdwg.mxu0
    %v358 = vpack.c.bf16 %v355, %v352
    %v359 = vld [vmem:[%s7] sm:$0x1]
    %v361 = vlaneseq
    %v362 = vshrl.u32 %v361, 7
    %v363 = vsub.s32 0, %v362
    %v364 = vrot.slane %v359, %v363
    %366 = vmatprep.subr.bf16.mxu0 0
    %367 = vmatpush1.bf16.msra.mxu0 %v358
    %368 = vmatprep.subr.bf16.mxu0 0
    %369 = vmatpush1.bf16.msra.mxu0 0
    %370 = vmatprep.subr.bf16.mxu0 0
    %371 = vmatpush1.bf16.msra.mxu0 0
    %372 = vmatprep.subr.bf16.mxu0 0
    %373 = vmatpush1.bf16.msra.mxu0 0
    %374 = vmatprep.subr.bf16.mxu0 0
    %375 = vmatpush1.bf16.msra.mxu0 0
    %376 = vmatprep.subr.bf16.mxu0 0
    %377 = vmatpush1.bf16.msra.mxu0 0
    %378 = vmatprep.subr.bf16.mxu0 0
    %379 = vmatpush1.bf16.msra.mxu0 0
    %380 = vmatprep.subr.bf16.mxu0 0
    %381 = vmatpush1.bf16.msra.mxu0 0
    %382 = vmatprep.subr.bf16.mxu0 0
    %383 = vmatpush1.bf16.msra.mxu0 0
    %384 = vmatprep.subr.bf16.mxu0 0
    %385 = vmatpush1.bf16.msra.mxu0 0
    %386 = vmatprep.subr.bf16.mxu0 0
    %387 = vmatpush1.bf16.msra.mxu0 0
    %388 = vmatprep.subr.bf16.mxu0 0
    %389 = vmatpush1.bf16.msra.mxu0 0
    %390 = vmatprep.subr.bf16.mxu0 0
    %391 = vmatpush1.bf16.msra.mxu0 0
    %392 = vmatprep.subr.bf16.mxu0 0
    %393 = vmatpush1.bf16.msra.mxu0 0
    %394 = vmatprep.subr.bf16.mxu0 0
    %395 = vmatpush1.bf16.msra.mxu0 0
    %396 = vmatprep.subr.bf16.mxu0 0
    %397 = vmatpush1.bf16.msra.mxu0 0
    %398 = vmatprep.mubr.bf16.mxu0 0
    %399 = vmatmul.mubr.bf16.gmra.mrb[0].mxu0 %v131
    %v400 = vpop.f32.mrb[0].mxu0
    %v401 = vadd.f32 %v364, %v400
    %v402 = vpop.f32.mrb[0].mxu0
    %v403 = vpop.f32.mrb[0].mxu0
    %v404 = vadd.f32 %v364, %v403
    %v405 = vpop.f32.mrb[0].mxu0
    %406 = vdwg.mxu0
    %v407 = vld [vmem:[%s8] sm:$0x1]
    %v408 = vpack.c.bf16 %v404, %v401
    %v410 = vsel %vm129, %v407, 0
    %412 = vmatprep.subr.bf16.mxu0 0
    %413 = vmatpush1.bf16.msra.mxu0 %v408
    %414 = vmatprep.subr.bf16.mxu0 0
    %415 = vmatpush1.bf16.msra.mxu0 0
    %416 = vmatprep.subr.bf16.mxu0 0
    %417 = vmatpush1.bf16.msra.mxu0 0
    %418 = vmatprep.subr.bf16.mxu0 0
    %419 = vmatpush1.bf16.msra.mxu0 0
    %420 = vmatprep.subr.bf16.mxu0 0
    %421 = vmatpush1.bf16.msra.mxu0 0
    %422 = vmatprep.subr.bf16.mxu0 0
    %423 = vmatpush1.bf16.msra.mxu0 0
    %424 = vmatprep.subr.bf16.mxu0 0
    %425 = vmatpush1.bf16.msra.mxu0 0
    %426 = vmatprep.subr.bf16.mxu0 0
    %427 = vmatpush1.bf16.msra.mxu0 0
    %428 = vmatprep.subr.bf16.mxu0 0
    %429 = vmatpush1.bf16.msra.mxu0 0
    %430 = vmatprep.subr.bf16.mxu0 0
    %431 = vmatpush1.bf16.msra.mxu0 0
    %432 = vmatprep.subr.bf16.mxu0 0
    %433 = vmatpush1.bf16.msra.mxu0 0
    %434 = vmatprep.subr.bf16.mxu0 0
    %435 = vmatpush1.bf16.msra.mxu0 0
    %436 = vmatprep.subr.bf16.mxu0 0
    %437 = vmatpush1.bf16.msra.mxu0 0
    %438 = vmatprep.subr.bf16.mxu0 0
    %439 = vmatpush1.bf16.msra.mxu0 0
    %440 = vmatprep.subr.bf16.mxu0 0
    %441 = vmatpush1.bf16.msra.mxu0 0
    %442 = vmatprep.subr.bf16.mxu0 0
    %443 = vmatpush1.bf16.msra.mxu0 0
    %444 = vmatprep.mubr.bf16.mxu0 0
    %445 = vmatmul.mubr.bf16.gmra.mrb[0].mxu0 %v410
    %v446 = vpop.f32.mrb[0].mxu0
    %v447 = vadd.f32 0.0, %v446
    %v448 = vpop.f32.mrb[0].mxu0
    %v449 = vpop.f32.mrb[0].mxu0
    %v450 = vpop.f32.mrb[0].mxu0
    %451 = vdwg.mxu0
    %v452 = vld [vmem:[%s9] sm:$0x3]
    %v453 = vmul.f32 %v447, %v452
    %v454 = vpack.c.bf16 %v453, %v453
    %v455 = vld [vmem:[%s10] sm:$0xf]
    %v456 = vld [vmem:[%s10 + $0x4] sm:$0xf]
    %v457 = vld [vmem:[%s10 + $0x8] sm:$0xf]
    %v458 = vld [vmem:[%s10 + $0xc] sm:$0xf]
    %v459 = vld [vmem:[%s11] sm:$0x1]
    %v461 = vlaneseq
    %v462 = vshrl.u32 %v461, 7
    %v463 = vsub.s32 0, %v462
    %v464 = vrot.slane %v459, %v463
    %v470 = vunpack.c.l.b16 %v455
    %v471 = vunpack.c.l.b16 %v456
    %v472 = vunpack.c.l.b16 %v457
    %v473 = vunpack.c.l.b16 %v458
    %v474 = vpack.c.b16 %v471, %v470
    %v475 = vpack.c.b16 %v473, %v472
    %v479 = vsel %vm197, %v454, 0
    %481 = vmatprep.subr.bf16.mxu0 0
    %482 = vmatpush1.bf16.msra.mxu0 %v474
    %483 = vmatprep.subr.bf16.mxu0 0
    %484 = vmatpush1.bf16.msra.mxu0 %v475
    %485 = vmatprep.subr.bf16.mxu0 0
    %486 = vmatpush1.bf16.msra.mxu0 0
    %487 = vmatprep.subr.bf16.mxu0 0
    %488 = vmatpush1.bf16.msra.mxu0 0
    %489 = vmatprep.subr.bf16.mxu0 0
    %490 = vmatpush1.bf16.msra.mxu0 0
    %491 = vmatprep.subr.bf16.mxu0 0
    %492 = vmatpush1.bf16.msra.mxu0 0
    %493 = vmatprep.subr.bf16.mxu0 0
    %494 = vmatpush1.bf16.msra.mxu0 0
    %495 = vmatprep.subr.bf16.mxu0 0
    %496 = vmatpush1.bf16.msra.mxu0 0
    %497 = vmatprep.subr.bf16.mxu0 0
    %498 = vmatpush1.bf16.msra.mxu0 0
    %499 = vmatprep.subr.bf16.mxu0 0
    %500 = vmatpush1.bf16.msra.mxu0 0
    %501 = vmatprep.subr.bf16.mxu0 0
    %502 = vmatpush1.bf16.msra.mxu0 0
    %503 = vmatprep.subr.bf16.mxu0 0
    %504 = vmatpush1.bf16.msra.mxu0 0
    %505 = vmatprep.subr.bf16.mxu0 0
    %506 = vmatpush1.bf16.msra.mxu0 0
    %507 = vmatprep.subr.bf16.mxu0 0
    %508 = vmatpush1.bf16.msra.mxu0 0
    %509 = vmatprep.subr.bf16.mxu0 0
    %510 = vmatpush1.bf16.msra.mxu0 0
    %511 = vmatprep.subr.bf16.mxu0 0
    %512 = vmatpush1.bf16.msra.mxu0 0
    %513 = vmatprep.mubr.bf16.mxu0 0
    %514 = vmatmul.mubr.bf16.gmra.mrb[0].mxu0 %v479
    %v515 = vpop.f32.mrb[0].mxu0
    %v516 = vadd.f32 %v464, %v515
    %v517 = vpop.f32.mrb[0].mxu0
    %v518 = vpop.f32.mrb[0].mxu0
    %v519 = vpop.f32.mrb[0].mxu0
    %520 = vdwg.mxu0
    %vm521 = vcmask 9216
    %v522 = vsel %vm521, %v516, -inf
    %523 = vmax.xlane.f32.xlu0 %v522
    %v524 = vpop.xlane.xlu0 %523
    %v525 = vsub.f32 %v516, %v524
    %v526 = vmul.f32 %v525, 1.442695
    %v527 = vpow.pop %v526
    %v528 = vsel %vm521, %v527, 0.0
    %529 = vadd.xlane.f32.xlu0 %v528
    %v530 = vpop.xlane.xlu0 %529
    %v531 = vrcp.pop %v530
    %v532 = vmul.f32 %v527, %v531
    %533 = vst.msk [vmem:[#allocation5] sm:$0x3] %vm521, %v532
    // Predicated region
    $region54: #{tpu_custom_call.1} parent=1 // pred_check
      _
    $region55: #{tpu_custom_call.1} parent=1 // pred_check_branch
      %535 = sbr.rel (0) target = $region57
    $region56: #{tpu_custom_call.1} parent=1 // pred_region
      %s537 = ssub.s32 32, 32
      %538 = vsyncadd [#allocation4], %s537
      %s540 = sshll.u32 [#allocation5], 4
      %s541 = int_to_ptr.vmem [resolvable:$true] %s540
      %543 = dma.vmem_to_hbm [thread:$0]  %s541, 32, %s12, [#allocation4]
    $region57: #{tpu_custom_call.1} parent=1 // pred_fallthru
      _
    // Predicated region
    $region58: #{tpu_custom_call.1} parent=1 // pred_check
      _
    $region59: #{tpu_custom_call.1} parent=1 // pred_check_branch
      %545 = sbr.rel (0) target = $region61
    $region60: #{tpu_custom_call.1} parent=1 // pred_region
      %546 = dma.done [#allocation4], 32
    $region61: #{tpu_custom_call.1} parent=1 // pred_fallthru
      _
    %547 = vsyncpa [#allocation3], 1
    %548 = vsyncpa [#allocation4], 1

</llo_original>
